<compile_context>
chip_gen: v7x
topology: tpu7x:2x2x1
jax: 0.10.0
libtpu: 0.0.40
codegen_flags: <defaults>
</compile_context>

<pallas_src>
import functools

import jax
import jax.numpy as jnp
from jax.experimental import pallas as pl
from jax.experimental.pallas import tpu as pltpu


def _round_up(x: int, m: int) -> int:
    return ((x + m - 1) // m) * m


def _vmem_budget():
    """(target output-block bytes, vmem_limit_bytes), sized per TPU generation."""
    try:
        cap = pltpu.get_tpu_info().vmem_capacity_bytes
    except Exception:  # no TPU visible / interpret mode / older jax
        cap = 64 * 1024 * 1024
    if cap >= 128 * 1024 * 1024:          # v5e / v6e: 128 MiB physical VMEM
        return 4 * 1024 * 1024, 64 * 1024 * 1024
    return 2 * 1024 * 1024, 32 * 1024 * 1024   # v7x: 64 MiB physical VMEM


def _choose_tiles(B, n_pad_i, n_pad_lane, out_bytes, target_bytes, sub_align):
    """Pick (tile_b, tile_i) so each output block is ~target_bytes."""
    row_bytes = n_pad_lane * out_bytes
    max_rows = max(sub_align, target_bytes // row_bytes)
    if n_pad_i <= max_rows:
        tile_i = n_pad_i
    else:
        tile_i = sub_align
        t = sub_align
        while t <= min(n_pad_i, max_rows):
            if n_pad_i % t == 0:
                tile_i = t
            t += sub_align
    tile_b = 1
    if tile_i == n_pad_i:
        # Small-n case: fold several batches into one block to amortize the
        # fixed per-grid-step pipeline overhead (this op is pure HBM writeback).
        per_batch = n_pad_i * row_bytes
        max_b = max(1, target_bytes // per_batch)
        for d in range(min(B, max_b), 0, -1):
            if B % d == 0:
                tile_b = d
                break
    return tile_b, tile_i


def _softsort_kernel(scores_ref, sorted_ref, out_ref, *,
                     neg_inv_tau, valid_n, tile_i, hard):
    # scores_ref : (TB, 1, NL)        full lane-padded row of original scores
    # sorted_ref : (TB, n_pad_i, 1)   whole descending-sorted column (batch-resident)
    # out_ref    : (TB, tile_i, NL)   lane-dense tile of the soft permutation matrix
    i = pl.program_id(1)
    row0 = pl.multiple_of(i * tile_i, tile_i)
    s = scores_ref[...]                                   # (TB, 1, NL)
    srt = sorted_ref[:, pl.ds(row0, tile_i), :]           # (TB, TI, 1)

    diff = s - srt                                        # (TB, TI, NL) broadcast
    n_lanes = diff.shape[-1]
    need_mask = valid_n < n_lanes
    lane_i = None
    if hard or need_mask:
        lane_i = jax.lax.broadcasted_iota(jnp.int32, diff.shape, dimension=2)

    if hard:
        # Forward value of the straight-through branch is exactly the one-hot of
        # the per-row argmax of P_hat == the FIRST column with an exact match
        # (sorted is an exact copy of some scores entry). Emit it directly: no
        # extra n^2 HBM round trip for argmax/one_hot/combine.
        hit = diff == jnp.float32(0.0)
        if need_mask:
            hit = jnp.logical_and(hit, lane_i < valid_n)
        lanef = lane_i.astype(jnp.float32)
        first = jnp.min(jnp.where(hit, lanef, jnp.float32(float(n_lanes))),
                        axis=-1, keepdims=True)
        out_ref[...] = (lanef == first).astype(out_ref.dtype)
    else:
        # NOTE: no max-subtraction. logits <= 0 and every valid row contains an
        # exact zero diff (sorted is a permutation of scores) => max(logits)==0.
        e = jnp.exp((diff * diff) * jnp.float32(neg_inv_tau))     # EUP, in (0, 1]
        if need_mask:
            e = jnp.where(lane_i < valid_n, e, jnp.float32(0.0))  # kill padded lanes
        denom = jnp.sum(e, axis=-1, keepdims=True)                # XLU row reduce
        # Exact divide (not approx reciprocal): rows must sum to 1; HBM-bound anyway.
        out_ref[...] = (e / denom).astype(out_ref.dtype)


def softsort_p2(scores: jax.Array,
                tau: float = 1.0,
                hard: bool = False,
                out_dtype=jnp.float32,
                tile_i: int | None = None,
                tile_b: int | None = None) -> jax.Array:
    """Pallas TPU implementation of SoftSort_p2.forward.  scores: (B, n)."""
    scores = scores.astype(jnp.float32)
    B, n = scores.shape
    if B <= 0 or n <= 0:
        raise ValueError("scores must be a non-empty (B, n) array")

    out_bytes = jnp.dtype(out_dtype).itemsize
    sub_align = max(8, 32 // max(out_bytes, 1))     # 8 for f32, 16 for bf16
    n_pad_i = _round_up(n, sub_align)               # sorted / i axis (sublane)
    n_pad_lane = _round_up(n, 128)                  # scores / j axis (lane)

    # Descending sort along dim=1 (glue; no efficient in-kernel TPU sort).
    sorted_desc = -jnp.sort(-scores, axis=1)

    # Edge-pad so padded sorted rows still have an exact score match (no 0/0),
    # and reshape so scores land lane-dense and sorted lands on the sublane axis.
    scores_row = jnp.pad(scores, ((0, 0), (0, n_pad_lane - n)), mode="edge")
    scores_row = scores_row.reshape(B, 1, n_pad_lane)
    sorted_col = jnp.pad(sorted_desc, ((0, 0), (0, n_pad_i - n)), mode="edge")
    sorted_col = sorted_col.reshape(B, n_pad_i, 1)

    target_bytes, vmem_limit = _vmem_budget()
    auto_b, auto_i = _choose_tiles(B, n_pad_i, n_pad_lane, out_bytes,
                                   target_bytes, sub_align)
    if tile_i is None:
        tile_i = auto_i
    if tile_b is None:
        tile_b = auto_b if tile_i == n_pad_i else 1

    if not (tile_i == n_pad_i or (tile_i % sub_align == 0 and n_pad_i % tile_i == 0)):
        raise ValueError(f"tile_i={tile_i} must divide padded n={n_pad_i} and be a "
                         f"multiple of {sub_align}")
    if B % tile_b != 0:
        raise ValueError(f"tile_b={tile_b} must divide B={B}")

    kernel = functools.partial(_softsort_kernel,
                               neg_inv_tau=-1.0 / float(tau),
                               valid_n=n, tile_i=tile_i, hard=bool(hard))

    grid = (B // tile_b, n_pad_i // tile_i)

    p_hat = pl.pallas_call(
        kernel,
        out_shape=jax.ShapeDtypeStruct((B, n_pad_i, n_pad_lane), out_dtype),
        grid=grid,
        in_specs=[
            # Full scores row per batch-block; independent of i -> stays resident.
            pl.BlockSpec((tile_b, 1, n_pad_lane), lambda b, i: (b, 0, 0)),
            # Whole sorted column per batch-block; sliced in-kernel with pl.ds,
            # so there is no tiny strided DMA per i-step.
            pl.BlockSpec((tile_b, n_pad_i, 1), lambda b, i: (b, 0, 0)),
        ],
        # Lane-dense output slab: last dim is a multiple of 128 -> unmasked vst.
        out_specs=pl.BlockSpec((tile_b, tile_i, n_pad_lane), lambda b, i: (b, i, 0)),
        compiler_params=pltpu.CompilerParams(
            dimension_semantics=("parallel", "parallel"),  # megacore splits the grid
            vmem_limit_bytes=vmem_limit,
        ),
    )(scores_row, sorted_col)

    if n_pad_i != n or n_pad_lane != n:
        p_hat = p_hat[:, :n, :n]

    # TODO(synk): training with hard=True needs a custom_vjp for the
    # straight-through estimator (stop_gradient(P - P_hat) + P_hat); only the
    # forward value (exactly P) is produced here.
    return p_hat


def _reference_softsort_p2(scores, tau=1.0):
    s = scores.astype(jnp.float32)[..., None]            # (B, n, 1)
    sorted_desc = -jnp.sort(-s, axis=1)                  # (B, n, 1)
    pairwise = -((jnp.swapaxes(s, 1, 2) - sorted_desc) ** 2) / tau
    return jax.nn.softmax(pairwise, axis=-1)


if __name__ == "__main__":
    key = jax.random.PRNGKey(0)

    # 1) Small "batch x n" shape; n=8 exercises lane padding (128) + masking.
    B, n = 2, 8
    scores = jax.random.normal(key, (B, n), dtype=jnp.float32)
    out = jax.block_until_ready(softsort_p2(scores, tau=1.0, hard=False))
    ref = _reference_softsort_p2(scores, tau=1.0)
    assert out.shape == (B, n, n)
    assert jnp.allclose(out, ref, atol=1e-5, rtol=1e-5), "mismatch vs reference"
    assert jnp.allclose(jnp.sum(out, axis=-1), 1.0, atol=1e-4), "rows must sum to 1"

    # 2) Multi-step i-tiling with the batch-resident sorted column.
    B2, n2 = 2, 128
    scores2 = jax.random.normal(jax.random.PRNGKey(1), (B2, n2), dtype=jnp.float32)
    out2 = jax.block_until_ready(softsort_p2(scores2, tau=0.5, tile_i=32, tile_b=1))
    ref2 = _reference_softsort_p2(scores2, tau=0.5)
    assert jnp.allclose(out2, ref2, atol=1e-5, rtol=1e-5), "tiled mismatch vs reference"

    # 3) Ragged n (neither multiple of 8 nor 128): wrapper pads, kernel masks.
    B3, n3 = 2, 12
    scores3 = jax.random.normal(jax.random.PRNGKey(2), (B3, n3), dtype=jnp.float32)
    out3 = jax.block_until_ready(softsort_p2(scores3, tau=1.0))
    ref3 = _reference_softsort_p2(scores3, tau=1.0)
    assert out3.shape == (B3, n3, n3)
    assert jnp.allclose(out3, ref3, atol=1e-5, rtol=1e-5), "ragged mismatch vs reference"

    # 4) hard=True: one-hot emitted inside the kernel (no extra n^2 HBM pass).
    out_h = jax.block_until_ready(softsort_p2(scores, tau=1.0, hard=True))
    ref_h = jax.nn.one_hot(jnp.argmax(ref, axis=-1), n, dtype=jnp.float32)
    assert jnp.allclose(out_h, ref_h), "hard path mismatch vs reference argmax"
    assert bool(jnp.all((out_h == 0.0) | (out_h == 1.0)))
    assert jnp.allclose(jnp.sum(out_h, axis=-1), 1.0)

    # 5) bf16 output path (HBM-write-bound op -> halves output bytes).
    out_bf = jax.block_until_ready(softsort_p2(scores2, tau=0.5, out_dtype=jnp.bfloat16))
    assert jnp.allclose(out_bf.astype(jnp.float32), ref2, atol=2e-2, rtol=2e-2)

    print("KERNEL_OK")
</pallas_src>

<mosaic_0001>
module attributes {stable_mosaic.version = 11 : i64} {
  func.func @_softsort_kernel(%arg0: i32, %arg1: i32, %arg2: memref<2x1x128xf32, #tpu.memory_space<vmem>>, %arg3: memref<2x8x1xf32, #tpu.memory_space<vmem>>, %arg4: memref<2x8x128xf32, #tpu.memory_space<vmem>>) attributes {dimension_semantics = [#tpu.dimension_semantics<parallel>, #tpu.dimension_semantics<parallel>], iteration_bounds = array<i64: 1, 1>, scalar_prefetch = 0 : i64, scratch_operands = 0 : i64, tpu.core_type = #tpu.core_type<tc>, window_params = [{transform_indices = @transform_0, window_bounds = array<i64: 2, 1, 128>}, {transform_indices = @transform_1, window_bounds = array<i64: 2, 8, 1>}, {transform_indices = @transform_2, window_bounds = array<i64: 2, 8, 128>}]} {
    %c8_i32 = arith.constant 8 : i32
    %0 = arith.muli %arg1, %c8_i32 : i32
    %1 = tpu.assume_multiple %0, 8 : i32
    %c0 = arith.constant 0 : index
    %c0_0 = arith.constant 0 : index
    %c0_1 = arith.constant 0 : index
    %2 = vector.load %arg2[%c0, %c0_0, %c0_1] : memref<2x1x128xf32, #tpu.memory_space<vmem>>, vector<2x1x128xf32>
    %c0_2 = arith.constant 0 : index
    %3 = arith.index_cast %1 : i32 to index
    %c0_3 = arith.constant 0 : index
    %4 = vector.load %arg3[%c0_2, %3, %c0_3] : memref<2x8x1xf32, #tpu.memory_space<vmem>>, vector<2x8x1xf32>
    %5 = vector.broadcast %2 : vector<2x1x128xf32> to vector<2x8x128xf32>
    %6 = vector.broadcast %4 : vector<2x8x1xf32> to vector<2x8x128xf32>
    %7 = arith.subf %5, %6 : vector<2x8x128xf32>
    %8 = tpu.iota {dimensions = array<i32: 2>} : vector<2x8x128xi32>
    %9 = arith.mulf %7, %7 : vector<2x8x128xf32>
    %cst = arith.constant -1.000000e+00 : f32
    %10 = vector.broadcast %cst : f32 to vector<2x8x128xf32>
    %11 = arith.mulf %9, %10 : vector<2x8x128xf32>
    %12 = math.exp %11 : vector<2x8x128xf32>
    %c8_i32_4 = arith.constant 8 : i32
    %13 = vector.broadcast %c8_i32_4 : i32 to vector<2x8x128xi32>
    %14 = arith.cmpi slt, %8, %13 : vector<2x8x128xi32>
    %cst_5 = arith.constant 0.000000e+00 : f32
    %15 = vector.broadcast %cst_5 : f32 to vector<2x8x128xf32>
    %16 = arith.select %14, %12, %15 : vector<2x8x128xi1>, vector<2x8x128xf32>
    %cst_6 = arith.constant dense<0.000000e+00> : vector<2x8xf32>
    %17 = vector.multi_reduction <add>, %16, %cst_6 [2] : vector<2x8x128xf32> to vector<2x8xf32>
    %18 = vector.shape_cast %17 : vector<2x8xf32> to vector<2x8x1xf32>
    %19 = vector.broadcast %18 : vector<2x8x1xf32> to vector<2x8x128xf32>
    %20 = arith.divf %16, %19 : vector<2x8x128xf32>
    %c0_7 = arith.constant 0 : index
    %c0_8 = arith.constant 0 : index
    %c0_9 = arith.constant 0 : index
    %21 = vector.load %arg4[%c0_7, %c0_8, %c0_9] : memref<2x8x128xf32, #tpu.memory_space<vmem>>, vector<2x8x128xf32>
    tpu.vector_store %arg4[%c0_7, %c0_8, %c0_9], %20 {strides = array<i32>} : memref<2x8x128xf32, #tpu.memory_space<vmem>>, vector<2x8x128xf32>,
    return
  }
  func.func @transform_0(%arg0: i32, %arg1: i32) -> (i32, i32, i32) {
    %c0_i32 = arith.constant 0 : i32
    %c0_i32_0 = arith.constant 0 : i32
    %c0_i32_1 = arith.constant 0 : i32
    return %arg0, %c0_i32, %c0_i32_0 : i32, i32, i32
  }
  func.func @transform_1(%arg0: i32, %arg1: i32) -> (i32, i32, i32) {
    %c0_i32 = arith.constant 0 : i32
    %c0_i32_0 = arith.constant 0 : i32
    %c0_i32_1 = arith.constant 0 : i32
    return %arg0, %c0_i32, %c0_i32_0 : i32, i32, i32
  }
  func.func @transform_2(%arg0: i32, %arg1: i32) -> (i32, i32, i32) {
    %c0_i32 = arith.constant 0 : i32
    %c0_i32_0 = arith.constant 0 : i32
    return %arg0, %arg1, %c0_i32 : i32, i32, i32
  }
}

</mosaic_0001>

<llo_original>
// kernel: tpu_custom_call.1
$region0: #{tpu_custom_call.1}
  #allocation0 [shape = 'u32[]', space=smem, size = 0x4, offset = 0x4, fixed_abs, tag = 'smem constant byte address 0x4 - core index']
  #allocation1 [shape = 'u32[144,128]{1,0:T(1,128)}', space=vmem, size = 0x12000, scoped, tag = 'internal scratch']
  %s0 = inlined_call_operand.vmem [shape: f32[2,1,128], index: 0, kind: input, shape index: {}]
  %s1 = inlined_call_operand.vmem [shape: f32[2,8,1], index: 1, kind: input, shape index: {}]
  %s2 = inlined_call_operand.hbm [shape: f32[2,8,128], index: 2, kind: output, shape index: {}]
  %s3 = sld [smem:[#allocation0]]
  $region18: #{tpu_custom_call.1} parent=0
    _
  %s5 = ssub.s32 1, %s3
  %s6 = scalar_select 0, %s5, %s3
  $region1: #{tpu_custom_call.1} parent=0
    #allocation2 [shape = 'u8[8192]{0}', space=vmem, size = 0x2000, scoped, tag = 'output window, operand 0, single buffered']
    #allocation3 [shape = 's32[1]{0}', space=sflag, size = 0x4, scoped, tag = 'scoped memory for tpu_custom_call.1']
    %7 = vsyncpa [#allocation3], 0
    // Predicated region
    $region2: #{tpu_custom_call.1} parent=1 // pred_check
      _
    $region3: #{tpu_custom_call.1} parent=1 // pred_check_branch
      %9 = sbr.rel (0) target = $region5
    $region4: #{tpu_custom_call.1} parent=1 // pred_region
      _
    $region5: #{tpu_custom_call.1} parent=1 // pred_fallthru
      _
    // Predicated region
    $region6: #{tpu_custom_call.1} parent=1 // pred_check
      _
    $region7: #{tpu_custom_call.1} parent=1 // pred_check_branch
      %11 = sbr.rel (0) target = $region9
    $region8: #{tpu_custom_call.1} parent=1 // pred_region
      _
    $region9: #{tpu_custom_call.1} parent=1 // pred_fallthru
      _
    %s12 = smul.u32 0, 8
    %v13 = vld [vmem:[%s0] sm:$0x1]
    %v14 = vld [vmem:[%s0 + $0x1] sm:$0x1]
    %s15 = scalar_lea.vmem %s1, %s12
    %v16 = vld [vmem:[%s15] sm:$0xff]
    %v17 = vld [vmem:[%s15 + $0x8] sm:$0xff]
    %v20 = vlaneseq
    %v21 = vshrl.u32 %v20, 7
    %v22 = vsub.s32 0, %v21
    %v23 = vrot.slane %v13, %v22
    %v24 = vlaneseq
    %v25 = vshrl.u32 %v24, 7
    %v26 = vsub.s32 0, %v25
    %v27 = vrot.slane %v14, %v26
    %31 = vset.pattern.permute.xlu0 0
    %32 = vperm.xlu0 %31, %v16
    %v33 = vpop.permute.xlu0 %32
    %36 = vset.pattern.permute.xlu0 0
    %37 = vperm.xlu0 %36, %v17
    %v38 = vpop.permute.xlu0 %37
    %v40 = vsub.f32 %v23, %v33
    %v41 = vsub.f32 %v27, %v38
    %v42 = vlaneseq
    %v43 = vand.u32 %v42, 127
    %v44 = vmul.f32 %v40, %v40
    %v45 = vmul.f32 %v41, %v41
    %v46 = vmul.f32 %v44, -1.0
    %v47 = vmul.f32 %v45, -1.0
    %v48 = vmul.f32 %v46, 1.442695
    %v49 = vpow.pop %v48
    %v50 = vmul.f32 %v47, 1.442695
    %v51 = vpow.pop %v50
    %vm52 = vcmp.lt.s32.totalorder %v43, 8
    %v53 = vsel %vm52, %v49, 0.0
    %v54 = vsel %vm52, %v51, 0.0
    %55 = vadd.xlane.f32.xlu0 %v53
    %v56 = vpop.xlane.xlu0 %55
    %57 = vadd.xlane.f32.xlu0 %v54
    %v58 = vpop.xlane.xlu0 %57
    %v59 = vrcp.pop %v56
    %v60 = vmul.f32 %v53, %v59
    %v61 = vrcp.pop %v58
    %v62 = vmul.f32 %v54, %v61
    %63 = vst [vmem:[#allocation2] sm:$0xff] %v60
    %64 = vst [vmem:[#allocation2 + $0x8] sm:$0xff] %v62
    // Predicated region
    $region10: #{tpu_custom_call.1} parent=1 // pred_check
      _
    $region11: #{tpu_custom_call.1} parent=1 // pred_check_branch
      %66 = sbr.rel (0) target = $region13
    $region12: #{tpu_custom_call.1} parent=1 // pred_region
      %s68 = ssub.s32 256, 256
      %69 = vsyncadd [#allocation3], %s68
      %s70 = sshll.u32 [#allocation2], 4
      %s71 = int_to_ptr.vmem [resolvable:$true] %s70
      %76 = dma.vmem_to_hbm [thread:$0]  %s71, 256, %s2, [#allocation3], 128, 128, 8
    $region13: #{tpu_custom_call.1} parent=1 // pred_fallthru
      _
    // Predicated region
    $region14: #{tpu_custom_call.1} parent=1 // pred_check
      _
    $region15: #{tpu_custom_call.1} parent=1 // pred_check_branch
      %78 = sbr.rel (0) target = $region17
    $region16: #{tpu_custom_call.1} parent=1 // pred_region
      %79 = dma.done [#allocation3], 256
    $region17: #{tpu_custom_call.1} parent=1 // pred_fallthru
      _
    %80 = vsyncpa [#allocation3], 1

</llo_original>
